<compile_context>
chip_gen: v7x
topology: tpu7x:2x2x1
jax: 0.10.0
libtpu: 0.0.40
codegen_flags: <defaults>
</compile_context>

<pallas_src>
import jax
import jax.numpy as jnp
from jax.experimental import pallas as pl
from jax.experimental.pallas import tpu as pltpu

# Row layout of the packed (17, W*P) per-channel vector input `vecs`:
#   rows 0..8 : 3x3 depthwise taps, row = ky*3 + kx (BN2 scale + W-boundary mask folded)
#   row 9/10/11: conv1/conv2/conv3 folded-BN biases, tiled per pixel column
#   row 12    : conv3 bias projected through conv_mask (first W lanes valid)
#   row 13    : channel_add conv-a bias        (first P lanes valid)
#   row 14/15 : LayerNorm gamma / beta         (first P lanes valid)
#   row 16    : channel_add conv-b bias, tiled per pixel column
_ROW_B1, _ROW_B2, _ROW_B3, _ROW_B3M = 9, 10, 11, 12
_ROW_BA1, _ROW_LNG, _ROW_LNB, _ROW_BA2 = 13, 14, 15, 16
_NROWS = 17


def bottleneck_kernel(x_ref, w1_ref, w3f_ref, rexp_ref, wa1_ref, wa2b_ref,
                      vecs_ref, o_ref):
    f32, bf16 = jnp.float32, jnp.bfloat16
    H = x_ref.shape[1]
    P = wa1_ref.shape[0]
    WP = w1_ref.shape[1]
    W = WP // P

    V = vecs_ref[...]                              # (17, W*P) packed per-channel rows
    x = x_ref[0].astype(f32)                       # (H, W*C) lane-dense residual slab

    # ---- conv1 (1x1, no bias) + bn1 (folded) + relu: bf16 block-diagonal MXU matmul
    y = jnp.dot(x.astype(bf16), w1_ref[...], preferred_element_type=f32)
    y = jnp.maximum(y + V[_ROW_B1:_ROW_B1 + 1], 0.0)

    # ---- conv2: 3x3 depthwise (stride 1, pad 1) + bn2 (folded into taps) + relu.
    # Shifts run on the XLU (pltpu.roll); taps are VPU FMAs.  W-direction zero padding
    # is folded into the tap rows on the host; H-direction boundary rows masked here.
    ri = jax.lax.broadcasted_iota(jnp.int32, (H, WP), 0)
    y_dn = jnp.where(ri > 0, pltpu.roll(y, 1, axis=0), 0.0)          # y[h-1, :]
    y_up = jnp.where(ri < H - 1, pltpu.roll(y, H - 1, axis=0), 0.0)  # y[h+1, :]

    def taps(src, ky):        # kx=0 reads w-1 (roll +P), kx=2 reads w+1 (roll -P)
        k = 3 * ky
        return (V[k + 0:k + 1] * pltpu.roll(src, P, axis=1)
                + V[k + 1:k + 2] * src
                + V[k + 2:k + 3] * pltpu.roll(src, WP - P, axis=1))

    c = taps(y_dn, 0) + taps(y, 1) + taps(y_up, 2)
    y = jnp.maximum(c + V[_ROW_B2:_ROW_B2 + 1], 0.0)

    # ---- conv3 (1x1) + bn3, fused with the GC attention-logit projection:
    # one matmul against [w3bd | w3bd @ conv_mask_kron], then slice z / logits apart.
    zf = jnp.dot(y.astype(bf16), w3f_ref[...], preferred_element_type=f32)
    z = zf[:, :WP] + V[_ROW_B3:_ROW_B3 + 1]                     # (H, W*P)
    logits = zf[:, WP:WP + W] + V[_ROW_B3M:_ROW_B3M + 1, :W]    # (H, W)

    # ---- GC spatial pooling: softmax over all H*W positions ('att' path).
    # Staged single-axis reductions (lanes then sublanes) for robust lowering.
    mx = jnp.max(jnp.max(logits, axis=1, keepdims=True), axis=0, keepdims=True)
    e = jnp.exp(logits - mx)
    denom = jnp.sum(jnp.sum(e, axis=1, keepdims=True), axis=0, keepdims=True)
    attn = e * pl.reciprocal(denom, approx=True)                # (H, W)

    # context[p] = sum_{h,w} attn[h,w] * z[h, w*P + p]
    attn_slab = jnp.dot(attn.astype(bf16), rexp_ref[...],
                        preferred_element_type=f32)             # (H, W*P)
    csum = jnp.sum(attn_slab * z, axis=0, keepdims=True)        # (1, W*P)
    s = WP // 2
    while s >= P:                                               # log2(W) lane-roll folds
        csum = csum + pltpu.roll(csum, WP - s, axis=1)
        s //= 2
    context = csum[:, :P]                                       # (1, P)

    # ---- channel_add_conv: 1x1(bias) -> LayerNorm([C,1,1]) -> ReLU -> 1x1(bias).
    # The final 1x1 has the per-pixel broadcast folded into wa2b on the host.
    t = (jnp.dot(context.astype(bf16), wa1_ref[...], preferred_element_type=f32)
         + V[_ROW_BA1:_ROW_BA1 + 1, :P])                        # (1, P)
    mu = jnp.mean(t, axis=1, keepdims=True)
    var = jnp.mean((t - mu) ** 2, axis=1, keepdims=True)
    t = ((t - mu) * jax.lax.rsqrt(var + 1e-5) * V[_ROW_LNG:_ROW_LNG + 1, :P]
         + V[_ROW_LNB:_ROW_LNB + 1, :P])
    t = jnp.maximum(t, 0.0)
    t_slab = (jnp.dot(t.astype(bf16), wa2b_ref[...], preferred_element_type=f32)
              + V[_ROW_BA2:_ROW_BA2 + 1])                       # (1, W*P)

    # ---- residual add + final relu
    o_ref[0] = jnp.maximum(z + t_slab + x, 0.0).astype(o_ref.dtype)


def prepare_params(p, W):
    """Fold BN scales into conv weights, build block-diagonal / fused bf16 MXU
    operands, and pack all per-channel 1-row vectors into one (17, W*P) array.
    Call ONCE per set of weights (hoisted out of the jitted forward)."""
    f32, bf16 = jnp.float32, jnp.bfloat16
    C, P = p["w1"].shape
    WP = W * P
    eye_w = jnp.eye(W, dtype=f32)

    w1s = (p["w1"] * p["s1"]).astype(f32)          # (C, P)  bn1 scale folded
    w2s = (p["w2"] * p["s2"]).astype(f32)          # (9, P)  bn2 scale folded
    w3s = (p["w3"] * p["s3"]).astype(f32)          # (P, P)  bn3 scale folded

    w1bd = jnp.kron(eye_w, w1s)                    # (W*C, W*P) block-diagonal
    w3bd = jnp.kron(eye_w, w3s)                    # (W*P, W*P)
    m_kron = jnp.kron(eye_w, p["wm"].astype(f32))  # (W*P, W)   conv_mask
    w3f = jnp.concatenate([w3bd, w3bd @ m_kron], axis=1)        # (W*P, W*P + W)
    rexp = jnp.kron(eye_w, jnp.ones((1, P), f32))               # (W, W*P) attn expand
    s_bcast = jnp.kron(jnp.ones((1, W), f32), jnp.eye(P, dtype=f32))  # (P, W*P)
    wa2b = p["wa2"].astype(f32) @ s_bcast          # (P, W*P) pixel broadcast folded

    def tile_row(v):                               # (1, P) -> (1, W*P), repeat per w
        return jnp.tile(v.astype(f32), (1, W))

    def pad_row(v):                                # (1, n) -> (1, W*P), zero padded
        return jnp.zeros((1, WP), f32).at[:, :v.shape[1]].set(v.astype(f32))

    b1t, b2t, b3t = tile_row(p["b1"]), tile_row(p["b2"]), tile_row(p["b3"])
    b3m = pad_row(b3t @ m_kron)                    # (1, W*P), first W lanes valid

    lane = jnp.arange(WP)
    mask_l = (lane >= P).astype(f32)[None, :]      # kx=0 reads w-1: invalid at w=0
    mask_r = (lane < WP - P).astype(f32)[None, :]  # kx=2 reads w+1: invalid at w=W-1
    tap_rows = []
    for k in range(9):                             # row = ky*3 + kx
        row = tile_row(w2s[k:k + 1])
        if k % 3 == 0:
            row = row * mask_l
        elif k % 3 == 2:
            row = row * mask_r
        tap_rows.append(row)

    vecs = jnp.concatenate(
        tap_rows + [b1t, b2t, b3t, b3m, pad_row(p["ba1"]), pad_row(p["lng"]),
                    pad_row(p["lnb"]), tile_row(p["ba2"])], axis=0)   # (17, W*P)
    assert vecs.shape == (_NROWS, WP)

    return dict(w1bd=w1bd.astype(bf16), w3f=w3f.astype(bf16),
                rexp=rexp.astype(bf16), wa1=p["wa1"].astype(bf16),
                wa2b=wa2b.astype(bf16), vecs=vecs)


@jax.jit
def bottleneck_forward(x_slab, w1bd, w3f, rexp, wa1, wa2b, vecs):
    B, H, WC = x_slab.shape
    WP = w1bd.shape[1]

    def const_spec(arr):                 # grid-invariant weight block (whole array)
        nd = arr.ndim
        return pl.BlockSpec(arr.shape, lambda b, _n=nd: (0,) * _n)

    fn = pl.pallas_call(
        bottleneck_kernel,
        out_shape=jax.ShapeDtypeStruct((B, H, WP), jnp.float32),
        grid=(B,),
        in_specs=[pl.BlockSpec((1, H, WC), lambda b: (b, 0, 0)),
                  const_spec(w1bd), const_spec(w3f), const_spec(rexp),
                  const_spec(wa1), const_spec(wa2b), const_spec(vecs)],
        out_specs=pl.BlockSpec((1, H, WP), lambda b: (b, 0, 0)),
        compiler_params=pltpu.CompilerParams(
            dimension_semantics=("parallel",)),
    )
    return fn(x_slab, w1bd, w3f, rexp, wa1, wa2b, vecs)


def bottleneck_mobile(x_nhwc, kp):
    """x_nhwc: (B, H, W, C) f32; kp: output of prepare_params. Returns (B, H, W, P)."""
    B, H, W, C = x_nhwc.shape
    P = kp["wa1"].shape[0]
    assert C == P, "expansion=1 / stride=1 / no downsample requires inplanes == planes"
    assert W & (W - 1) == 0, "lane-roll context fold assumes W is a power of two"
    x_slab = x_nhwc.reshape(B, H, W * C)           # free contiguous reshape (NHWC)
    out = bottleneck_forward(x_slab, kp["w1bd"], kp["w3f"], kp["rexp"],
                             kp["wa1"], kp["wa2b"], kp["vecs"])
    return out.reshape(B, H, W, P)


def reference(x, p):
    """Pure-JAX f32 reference of the same forward pass (NHWC, raw un-folded params)."""
    B, H, W, C = x.shape
    P = p["w1"].shape[1]
    HW = H * W
    xf = x.reshape(B, HW, C)
    y = jnp.maximum(xf @ p["w1"] * p["s1"] + p["b1"], 0.0)
    yp = jnp.pad(y.reshape(B, H, W, P), ((0, 0), (1, 1), (1, 1), (0, 0)))
    acc = jnp.zeros((B, H, W, P), jnp.float32)
    for ky in range(3):
        for kx in range(3):
            acc = acc + yp[:, ky:ky + H, kx:kx + W, :] * p["w2"][ky * 3 + kx]
    y = jnp.maximum(acc.reshape(B, HW, P) * p["s2"] + p["b2"], 0.0)
    z = y @ p["w3"] * p["s3"] + p["b3"]
    attn = jax.nn.softmax(z @ p["wm"], axis=1)                # (B, HW, 1)
    context = jnp.sum(z * attn, axis=1, keepdims=True)        # (B, 1, P)
    t = context @ p["wa1"] + p["ba1"]
    mu = jnp.mean(t, axis=-1, keepdims=True)
    var = jnp.mean((t - mu) ** 2, axis=-1, keepdims=True)
    t = (t - mu) / jnp.sqrt(var + 1e-5) * p["lng"] + p["lnb"]
    t = jnp.maximum(t, 0.0)
    t = t @ p["wa2"] + p["ba2"]
    out = jnp.maximum(z + t + xf, 0.0)
    return out.reshape(B, H, W, P)


def make_params(key, C, P):
    ks = jax.random.split(key, 16)

    def bn(k, c):
        k1, k2, k3, k4 = jax.random.split(k, 4)
        gamma = 1.0 + 0.1 * jax.random.normal(k1, (c,), jnp.float32)
        beta = 0.1 * jax.random.normal(k2, (c,), jnp.float32)
        mean = 0.1 * jax.random.normal(k3, (c,), jnp.float32)
        var = 1.0 + 0.1 * jax.random.uniform(k4, (c,), jnp.float32)
        scale = gamma / jnp.sqrt(var + 1e-5)
        bias = beta - mean * scale
        return scale.reshape(1, c), bias.reshape(1, c)

    s1, b1 = bn(ks[3], P)
    s2, b2 = bn(ks[4], P)
    s3, b3 = bn(ks[5], P)
    return dict(
        w1=0.1 * jax.random.normal(ks[0], (C, P), jnp.float32),
        w2=0.1 * jax.random.normal(ks[1], (9, P), jnp.float32),   # depthwise 3x3 taps
        w3=0.1 * jax.random.normal(ks[2], (P, P), jnp.float32),
        s1=s1, b1=b1, s2=s2, b2=b2, s3=s3, b3=b3,
        wm=0.1 * jax.random.normal(ks[6], (P, 1), jnp.float32),
        wa1=0.1 * jax.random.normal(ks[7], (P, P), jnp.float32),
        ba1=0.1 * jax.random.normal(ks[8], (1, P), jnp.float32),
        lng=1.0 + 0.1 * jax.random.normal(ks[9], (1, P), jnp.float32),
        lnb=0.1 * jax.random.normal(ks[10], (1, P), jnp.float32),
        wa2=0.1 * jax.random.normal(ks[11], (P, P), jnp.float32),
        ba2=0.1 * jax.random.normal(ks[12], (1, P), jnp.float32),
    )


if __name__ == "__main__":
    B, H, W = 2, 16, 16
    inplanes = planes = 8   # expansion=1, stride=1, downsample=None => inplanes == planes
    key = jax.random.PRNGKey(0)
    kx, kparam = jax.random.split(key)
    x = jax.random.normal(kx, (B, H, W, inplanes), jnp.float32)   # NHWC
    params = make_params(kparam, inplanes, planes)

    kp = prepare_params(params, W)        # host-side weight folding, done once
    out = jax.block_until_ready(bottleneck_mobile(x, kp))
    ref = jax.block_until_ready(reference(x, params))

    assert out.shape == (B, H, W, planes), out.shape
    if not jnp.allclose(out, ref, rtol=1e-2, atol=1e-2):
        raise AssertionError(
            f"mismatch: max abs diff={float(jnp.max(jnp.abs(out - ref)))}")
    print("KERNEL_OK")
</pallas_src>

<mosaic_0001>
module attributes {stable_mosaic.version = 11 : i64} {
  func.func @bottleneck_kernel(%arg0: i32, %arg1: memref<1x16x128xf32, #tpu.memory_space<vmem>>, %arg2: memref<128x128xbf16, #tpu.memory_space<vmem>>, %arg3: memref<128x144xbf16, #tpu.memory_space<vmem>>, %arg4: memref<16x128xbf16, #tpu.memory_space<vmem>>, %arg5: memref<8x8xbf16, #tpu.memory_space<vmem>>, %arg6: memref<8x128xbf16, #tpu.memory_space<vmem>>, %arg7: memref<17x128xf32, #tpu.memory_space<vmem>>, %arg8: memref<1x16x128xf32, #tpu.memory_space<vmem>>) attributes {dimension_semantics = [#tpu.dimension_semantics<parallel>], iteration_bounds = array<i64: 2>, scalar_prefetch = 0 : i64, scratch_operands = 0 : i64, tpu.core_type = #tpu.core_type<tc>, window_params = [{transform_indices = @transform_0, window_bounds = array<i64: 1, 16, 128>}, {pipeline_mode = #tpu.pipeline_mode<synchronous>, transform_indices = @transform_1, window_bounds = array<i64: 128, 128>}, {pipeline_mode = #tpu.pipeline_mode<synchronous>, transform_indices = @transform_2, window_bounds = array<i64: 128, 144>}, {pipeline_mode = #tpu.pipeline_mode<synchronous>, transform_indices = @transform_3, window_bounds = array<i64: 16, 128>}, {pipeline_mode = #tpu.pipeline_mode<synchronous>, transform_indices = @transform_4, window_bounds = array<i64: 8, 8>}, {pipeline_mode = #tpu.pipeline_mode<synchronous>, transform_indices = @transform_5, window_bounds = array<i64: 8, 128>}, {pipeline_mode = #tpu.pipeline_mode<synchronous>, transform_indices = @transform_6, window_bounds = array<i64: 17, 128>}, {transform_indices = @transform_7, window_bounds = array<i64: 1, 16, 128>}]} {
    %c0 = arith.constant 0 : index
    %c0_0 = arith.constant 0 : index
    %0 = vector.load %arg7[%c0, %c0_0] : memref<17x128xf32, #tpu.memory_space<vmem>>, vector<17x128xf32>
    %c0_1 = arith.constant 0 : index
    %c0_2 = arith.constant 0 : index
    %c0_3 = arith.constant 0 : index
    %1 = vector.load %arg1[%c0_1, %c0_2, %c0_3] : memref<1x16x128xf32, #tpu.memory_space<vmem>>, vector<1x16x128xf32>
    %2 = vector.shape_cast %1 : vector<1x16x128xf32> to vector<16x128xf32>
    %3 = arith.truncf %2 : vector<16x128xf32> to vector<16x128xbf16>
    %c0_4 = arith.constant 0 : index
    %c0_5 = arith.constant 0 : index
    %4 = vector.load %arg2[%c0_4, %c0_5] : memref<128x128xbf16, #tpu.memory_space<vmem>>, vector<128x128xbf16>
    %cst = arith.constant dense<0.000000e+00> : vector<16x128xf32>
    %5 = tpu.matmul %3, %4, %cst {dimension_numbers = #tpu.dot_dimension_numbers<[1], [0], [0], [1], [0, 0, 1, 1], [], []>} : vector<16x128xbf16>, vector<128x128xbf16>, vector<16x128xf32> -> vector<16x128xf32>
    %6 = vector.extract_strided_slice %0 {offsets = [9, 0], sizes = [1, 128], strides = [1, 1]} : vector<17x128xf32> to vector<1x128xf32>
    %7 = vector.broadcast %6 : vector<1x128xf32> to vector<16x128xf32>
    %8 = arith.addf %5, %7 : vector<16x128xf32>
    %cst_6 = arith.constant 0.000000e+00 : f32
    %9 = vector.broadcast %cst_6 : f32 to vector<16x128xf32>
    %10 = arith.maximumf %8, %9 : vector<16x128xf32>
    %11 = tpu.iota {dimensions = array<i32: 0>} : vector<16x128xi32>
    %c0_i32 = arith.constant 0 : i32
    %12 = vector.broadcast %c0_i32 : i32 to vector<16x128xi32>
    %13 = arith.cmpi sgt, %11, %12 : vector<16x128xi32>
    %c1_i32 = arith.constant 1 : i32
    %14 = tpu.dynamic_rotate %10 by %c1_i32 dim 0 : vector<16x128xf32>, i32 -> vector<16x128xf32>
    %cst_7 = arith.constant 0.000000e+00 : f32
    %15 = vector.broadcast %cst_7 : f32 to vector<16x128xf32>
    %16 = arith.select %13, %14, %15 : vector<16x128xi1>, vector<16x128xf32>
    %c15_i32 = arith.constant 15 : i32
    %17 = vector.broadcast %c15_i32 : i32 to vector<16x128xi32>
    %18 = arith.cmpi slt, %11, %17 : vector<16x128xi32>
    %c15_i32_8 = arith.constant 15 : i32
    %19 = tpu.dynamic_rotate %10 by %c15_i32_8 dim 0 : vector<16x128xf32>, i32 -> vector<16x128xf32>
    %cst_9 = arith.constant 0.000000e+00 : f32
    %20 = vector.broadcast %cst_9 : f32 to vector<16x128xf32>
    %21 = arith.select %18, %19, %20 : vector<16x128xi1>, vector<16x128xf32>
    %22 = vector.extract_strided_slice %0 {offsets = [0, 0], sizes = [1, 128], strides = [1, 1]} : vector<17x128xf32> to vector<1x128xf32>
    %c8_i32 = arith.constant 8 : i32
    %23 = tpu.dynamic_rotate %16 by %c8_i32 dim 1 : vector<16x128xf32>, i32 -> vector<16x128xf32>
    %24 = vector.broadcast %22 : vector<1x128xf32> to vector<16x128xf32>
    %25 = arith.mulf %24, %23 : vector<16x128xf32>
    %26 = vector.extract_strided_slice %0 {offsets = [1, 0], sizes = [1, 128], strides = [1, 1]} : vector<17x128xf32> to vector<1x128xf32>
    %27 = vector.broadcast %26 : vector<1x128xf32> to vector<16x128xf32>
    %28 = arith.mulf %27, %16 : vector<16x128xf32>
    %29 = arith.addf %25, %28 : vector<16x128xf32>
    %30 = vector.extract_strided_slice %0 {offsets = [2, 0], sizes = [1, 128], strides = [1, 1]} : vector<17x128xf32> to vector<1x128xf32>
    %c120_i32 = arith.constant 120 : i32
    %31 = tpu.dynamic_rotate %16 by %c120_i32 dim 1 : vector<16x128xf32>, i32 -> vector<16x128xf32>
    %32 = vector.broadcast %30 : vector<1x128xf32> to vector<16x128xf32>
    %33 = arith.mulf %32, %31 : vector<16x128xf32>
    %34 = arith.addf %29, %33 : vector<16x128xf32>
    %35 = vector.extract_strided_slice %0 {offsets = [3, 0], sizes = [1, 128], strides = [1, 1]} : vector<17x128xf32> to vector<1x128xf32>
    %c8_i32_10 = arith.constant 8 : i32
    %36 = tpu.dynamic_rotate %10 by %c8_i32_10 dim 1 : vector<16x128xf32>, i32 -> vector<16x128xf32>
    %37 = vector.broadcast %35 : vector<1x128xf32> to vector<16x128xf32>
    %38 = arith.mulf %37, %36 : vector<16x128xf32>
    %39 = vector.extract_strided_slice %0 {offsets = [4, 0], sizes = [1, 128], strides = [1, 1]} : vector<17x128xf32> to vector<1x128xf32>
    %40 = vector.broadcast %39 : vector<1x128xf32> to vector<16x128xf32>
    %41 = arith.mulf %40, %10 : vector<16x128xf32>
    %42 = arith.addf %38, %41 : vector<16x128xf32>
    %43 = vector.extract_strided_slice %0 {offsets = [5, 0], sizes = [1, 128], strides = [1, 1]} : vector<17x128xf32> to vector<1x128xf32>
    %c120_i32_11 = arith.constant 120 : i32
    %44 = tpu.dynamic_rotate %10 by %c120_i32_11 dim 1 : vector<16x128xf32>, i32 -> vector<16x128xf32>
    %45 = vector.broadcast %43 : vector<1x128xf32> to vector<16x128xf32>
    %46 = arith.mulf %45, %44 : vector<16x128xf32>
    %47 = arith.addf %42, %46 : vector<16x128xf32>
    %48 = arith.addf %34, %47 : vector<16x128xf32>
    %49 = vector.extract_strided_slice %0 {offsets = [6, 0], sizes = [1, 128], strides = [1, 1]} : vector<17x128xf32> to vector<1x128xf32>
    %c8_i32_12 = arith.constant 8 : i32
    %50 = tpu.dynamic_rotate %21 by %c8_i32_12 dim 1 : vector<16x128xf32>, i32 -> vector<16x128xf32>
    %51 = vector.broadcast %49 : vector<1x128xf32> to vector<16x128xf32>
    %52 = arith.mulf %51, %50 : vector<16x128xf32>
    %53 = vector.extract_strided_slice %0 {offsets = [7, 0], sizes = [1, 128], strides = [1, 1]} : vector<17x128xf32> to vector<1x128xf32>
    %54 = vector.broadcast %53 : vector<1x128xf32> to vector<16x128xf32>
    %55 = arith.mulf %54, %21 : vector<16x128xf32>
    %56 = arith.addf %52, %55 : vector<16x128xf32>
    %57 = vector.extract_strided_slice %0 {offsets = [8, 0], sizes = [1, 128], strides = [1, 1]} : vector<17x128xf32> to vector<1x128xf32>
    %c120_i32_13 = arith.constant 120 : i32
    %58 = tpu.dynamic_rotate %21 by %c120_i32_13 dim 1 : vector<16x128xf32>, i32 -> vector<16x128xf32>
    %59 = vector.broadcast %57 : vector<1x128xf32> to vector<16x128xf32>
    %60 = arith.mulf %59, %58 : vector<16x128xf32>
    %61 = arith.addf %56, %60 : vector<16x128xf32>
    %62 = arith.addf %48, %61 : vector<16x128xf32>
    %63 = vector.extract_strided_slice %0 {offsets = [10, 0], sizes = [1, 128], strides = [1, 1]} : vector<17x128xf32> to vector<1x128xf32>
    %64 = vector.broadcast %63 : vector<1x128xf32> to vector<16x128xf32>
    %65 = arith.addf %62, %64 : vector<16x128xf32>
    %cst_14 = arith.constant 0.000000e+00 : f32
    %66 = vector.broadcast %cst_14 : f32 to vector<16x128xf32>
    %67 = arith.maximumf %65, %66 : vector<16x128xf32>
    %68 = arith.truncf %67 : vector<16x128xf32> to vector<16x128xbf16>
    %c0_15 = arith.constant 0 : index
    %c0_16 = arith.constant 0 : index
    %69 = vector.load %arg3[%c0_15, %c0_16] : memref<128x144xbf16, #tpu.memory_space<vmem>>, vector<128x144xbf16>
    %cst_17 = arith.constant dense<0.000000e+00> : vector<16x144xf32>
    %70 = tpu.matmul %68, %69, %cst_17 {dimension_numbers = #tpu.dot_dimension_numbers<[1], [0], [0], [1], [0, 0, 1, 1], [], []>} : vector<16x128xbf16>, vector<128x144xbf16>, vector<16x144xf32> -> vector<16x144xf32>
    %71 = vector.extract_strided_slice %70 {offsets = [0, 0], sizes = [16, 128], strides = [1, 1]} : vector<16x144xf32> to vector<16x128xf32>
    %72 = vector.extract_strided_slice %0 {offsets = [11, 0], sizes = [1, 128], strides = [1, 1]} : vector<17x128xf32> to vector<1x128xf32>
    %73 = vector.broadcast %72 : vector<1x128xf32> to vector<16x128xf32>
    %74 = arith.addf %71, %73 : vector<16x128xf32>
    %75 = vector.extract_strided_slice %70 {offsets = [0, 128], sizes = [16, 16], strides = [1, 1]} : vector<16x144xf32> to vector<16x16xf32>
    %76 = vector.extract_strided_slice %0 {offsets = [12, 0], sizes = [1, 16], strides = [1, 1]} : vector<17x128xf32> to vector<1x16xf32>
    %77 = vector.broadcast %76 : vector<1x16xf32> to vector<16x16xf32>
    %78 = arith.addf %75, %77 : vector<16x16xf32>
    %cst_18 = arith.constant dense<0xFF800000> : vector<16xf32>
    %79 = vector.multi_reduction <maximumf>, %78, %cst_18 [1] : vector<16x16xf32> to vector<16xf32>
    %80 = vector.shape_cast %79 : vector<16xf32> to vector<16x1xf32>
    %cst_19 = arith.constant dense<0xFF800000> : vector<1xf32>
    %81 = vector.multi_reduction <maximumf>, %80, %cst_19 [0] : vector<16x1xf32> to vector<1xf32>
    %82 = vector.shape_cast %81 : vector<1xf32> to vector<1x1xf32>
    %83 = vector.broadcast %82 : vector<1x1xf32> to vector<16x16xf32>
    %84 = arith.subf %78, %83 : vector<16x16xf32>
    %85 = math.exp %84 : vector<16x16xf32>
    %cst_20 = arith.constant dense<0.000000e+00> : vector<16xf32>
    %86 = vector.multi_reduction <add>, %85, %cst_20 [1] : vector<16x16xf32> to vector<16xf32>
    %87 = vector.shape_cast %86 : vector<16xf32> to vector<16x1xf32>
    %cst_21 = arith.constant dense<0.000000e+00> : vector<1xf32>
    %88 = vector.multi_reduction <add>, %87, %cst_21 [0] : vector<16x1xf32> to vector<1xf32>
    %89 = vector.shape_cast %88 : vector<1xf32> to vector<1x1xf32>
    %90 = tpu.reciprocal %89 {approx = true} : vector<1x1xf32> -> vector<1x1xf32>
    %91 = vector.broadcast %90 : vector<1x1xf32> to vector<16x16xf32>
    %92 = arith.mulf %85, %91 : vector<16x16xf32>
    %93 = arith.truncf %92 : vector<16x16xf32> to vector<16x16xbf16>
    %c0_22 = arith.constant 0 : index
    %c0_23 = arith.constant 0 : index
    %94 = vector.load %arg4[%c0_22, %c0_23] : memref<16x128xbf16, #tpu.memory_space<vmem>>, vector<16x128xbf16>
    %cst_24 = arith.constant dense<0.000000e+00> : vector<16x128xf32>
    %95 = tpu.matmul %93, %94, %cst_24 {dimension_numbers = #tpu.dot_dimension_numbers<[1], [0], [0], [1], [0, 0, 1, 1], [], []>} : vector<16x16xbf16>, vector<16x128xbf16>, vector<16x128xf32> -> vector<16x128xf32>
    %96 = arith.mulf %95, %74 : vector<16x128xf32>
    %cst_25 = arith.constant dense<0.000000e+00> : vector<128xf32>
    %97 = vector.multi_reduction <add>, %96, %cst_25 [0] : vector<16x128xf32> to vector<128xf32>
    %98 = vector.shape_cast %97 : vector<128xf32> to vector<1x128xf32>
    %c64_i32 = arith.constant 64 : i32
    %99 = tpu.dynamic_rotate %98 by %c64_i32 dim 1 : vector<1x128xf32>, i32 -> vector<1x128xf32>
    %100 = arith.addf %98, %99 : vector<1x128xf32>
    %c96_i32 = arith.constant 96 : i32
    %101 = tpu.dynamic_rotate %100 by %c96_i32 dim 1 : vector<1x128xf32>, i32 -> vector<1x128xf32>
    %102 = arith.addf %100, %101 : vector<1x128xf32>
    %c112_i32 = arith.constant 112 : i32
    %103 = tpu.dynamic_rotate %102 by %c112_i32 dim 1 : vector<1x128xf32>, i32 -> vector<1x128xf32>
    %104 = arith.addf %102, %103 : vector<1x128xf32>
    %c120_i32_26 = arith.constant 120 : i32
    %105 = tpu.dynamic_rotate %104 by %c120_i32_26 dim 1 : vector<1x128xf32>, i32 -> vector<1x128xf32>
    %106 = arith.addf %104, %105 : vector<1x128xf32>
    %107 = vector.extract_strided_slice %106 {offsets = [0, 0], sizes = [1, 8], strides = [1, 1]} : vector<1x128xf32> to vector<1x8xf32>
    %108 = arith.truncf %107 : vector<1x8xf32> to vector<1x8xbf16>
    %c0_27 = arith.constant 0 : index
    %c0_28 = arith.constant 0 : index
    %109 = vector.load %arg5[%c0_27, %c0_28] : memref<8x8xbf16, #tpu.memory_space<vmem>>, vector<8x8xbf16>
    %cst_29 = arith.constant dense<0.000000e+00> : vector<1x8xf32>
    %110 = tpu.matmul %108, %109, %cst_29 {dimension_numbers = #tpu.dot_dimension_numbers<[1], [0], [0], [1], [0, 0, 1, 1], [], []>} : vector<1x8xbf16>, vector<8x8xbf16>, vector<1x8xf32> -> vector<1x8xf32>
    %111 = vector.extract_strided_slice %0 {offsets = [13, 0], sizes = [1, 8], strides = [1, 1]} : vector<17x128xf32> to vector<1x8xf32>
    %112 = arith.addf %110, %111 : vector<1x8xf32>
    %cst_30 = arith.constant dense<0.000000e+00> : vector<1xf32>
    %113 = vector.multi_reduction <add>, %112, %cst_30 [1] : vector<1x8xf32> to vector<1xf32>
    %114 = vector.shape_cast %113 : vector<1xf32> to vector<1x1xf32>
    %cst_31 = arith.constant 8.000000e+00 : f32
    %115 = vector.broadcast %cst_31 : f32 to vector<1x1xf32>
    %116 = arith.divf %114, %115 : vector<1x1xf32>
    %117 = vector.broadcast %116 : vector<1x1xf32> to vector<1x8xf32>
    %118 = arith.subf %112, %117 : vector<1x8xf32>
    %119 = arith.mulf %118, %118 : vector<1x8xf32>
    %cst_32 = arith.constant dense<0.000000e+00> : vector<1xf32>
    %120 = vector.multi_reduction <add>, %119, %cst_32 [1] : vector<1x8xf32> to vector<1xf32>
    %121 = vector.shape_cast %120 : vector<1xf32> to vector<1x1xf32>
    %cst_33 = arith.constant 8.000000e+00 : f32
    %122 = vector.broadcast %cst_33 : f32 to vector<1x1xf32>
    %123 = arith.divf %121, %122 : vector<1x1xf32>
    %124 = vector.broadcast %116 : vector<1x1xf32> to vector<1x8xf32>
    %125 = arith.subf %112, %124 : vector<1x8xf32>
    %cst_34 = arith.constant 9.99999974E-6 : f32
    %126 = vector.broadcast %cst_34 : f32 to vector<1x1xf32>
    %127 = arith.addf %123, %126 : vector<1x1xf32>
    %128 = math.rsqrt %127 : vector<1x1xf32>
    %129 = vector.broadcast %128 : vector<1x1xf32> to vector<1x8xf32>
    %130 = arith.mulf %125, %129 : vector<1x8xf32>
    %131 = vector.extract_strided_slice %0 {offsets = [14, 0], sizes = [1, 8], strides = [1, 1]} : vector<17x128xf32> to vector<1x8xf32>
    %132 = arith.mulf %130, %131 : vector<1x8xf32>
    %133 = vector.extract_strided_slice %0 {offsets = [15, 0], sizes = [1, 8], strides = [1, 1]} : vector<17x128xf32> to vector<1x8xf32>
    %134 = arith.addf %132, %133 : vector<1x8xf32>
    %cst_35 = arith.constant 0.000000e+00 : f32
    %135 = vector.broadcast %cst_35 : f32 to vector<1x8xf32>
    %136 = arith.maximumf %134, %135 : vector<1x8xf32>
    %137 = arith.truncf %136 : vector<1x8xf32> to vector<1x8xbf16>
    %c0_36 = arith.constant 0 : index
    %c0_37 = arith.constant 0 : index
    %138 = vector.load %arg6[%c0_36, %c0_37] : memref<8x128xbf16, #tpu.memory_space<vmem>>, vector<8x128xbf16>
    %cst_38 = arith.constant dense<0.000000e+00> : vector<1x128xf32>
    %139 = tpu.matmul %137, %138, %cst_38 {dimension_numbers = #tpu.dot_dimension_numbers<[1], [0], [0], [1], [0, 0, 1, 1], [], []>} : vector<1x8xbf16>, vector<8x128xbf16>, vector<1x128xf32> -> vector<1x128xf32>
    %140 = vector.extract_strided_slice %0 {offsets = [16, 0], sizes = [1, 128], strides = [1, 1]} : vector<17x128xf32> to vector<1x128xf32>
    %141 = arith.addf %139, %140 : vector<1x128xf32>
    %142 = vector.broadcast %141 : vector<1x128xf32> to vector<16x128xf32>
    %143 = arith.addf %74, %142 : vector<16x128xf32>
    %144 = arith.addf %143, %2 : vector<16x128xf32>
    %cst_39 = arith.constant 0.000000e+00 : f32
    %145 = vector.broadcast %cst_39 : f32 to vector<16x128xf32>
    %146 = arith.maximumf %144, %145 : vector<16x128xf32>
    %c0_40 = arith.constant 0 : index
    %c0_41 = arith.constant 0 : index
    %c0_42 = arith.constant 0 : index
    %147 = vector.load %arg8[%c0_40, %c0_41, %c0_42] : memref<1x16x128xf32, #tpu.memory_space<vmem>>, vector<1x16x128xf32>
    %148 = vector.shape_cast %147 : vector<1x16x128xf32> to vector<16x128xf32>
    %149 = vector.shape_cast %146 : vector<16x128xf32> to vector<1x16x128xf32>
    tpu.vector_store %arg8[%c0_40, %c0_41, %c0_42], %149 {strides = array<i32>} : memref<1x16x128xf32, #tpu.memory_space<vmem>>, vector<1x16x128xf32>,
    return
  }
  func.func @transform_0(%arg0: i32) -> (i32, i32, i32) {
    %c0_i32 = arith.constant 0 : i32
    %c0_i32_0 = arith.constant 0 : i32
    %c0_i32_1 = arith.constant 0 : i32
    return %arg0, %c0_i32, %c0_i32_0 : i32, i32, i32
  }
  func.func @transform_1(%arg0: i32) -> (i32, i32) {
    %c0_i32 = arith.constant 0 : i32
    %c0_i32_0 = arith.constant 0 : i32
    %c0_i32_1 = arith.constant 0 : i32
    return %c0_i32, %c0_i32_0 : i32, i32
  }
  func.func @transform_2(%arg0: i32) -> (i32, i32) {
    %c0_i32 = arith.constant 0 : i32
    %c0_i32_0 = arith.constant 0 : i32
    %c0_i32_1 = arith.constant 0 : i32
    return %c0_i32, %c0_i32_0 : i32, i32
  }
  func.func @transform_3(%arg0: i32) -> (i32, i32) {
    %c0_i32 = arith.constant 0 : i32
    %c0_i32_0 = arith.constant 0 : i32
    %c0_i32_1 = arith.constant 0 : i32
    return %c0_i32, %c0_i32_0 : i32, i32
  }
  func.func @transform_4(%arg0: i32) -> (i32, i32) {
    %c0_i32 = arith.constant 0 : i32
    %c0_i32_0 = arith.constant 0 : i32
    %c0_i32_1 = arith.constant 0 : i32
    return %c0_i32, %c0_i32_0 : i32, i32
  }
  func.func @transform_5(%arg0: i32) -> (i32, i32) {
    %c0_i32 = arith.constant 0 : i32
    %c0_i32_0 = arith.constant 0 : i32
    %c0_i32_1 = arith.constant 0 : i32
    return %c0_i32, %c0_i32_0 : i32, i32
  }
  func.func @transform_6(%arg0: i32) -> (i32, i32) {
    %c0_i32 = arith.constant 0 : i32
    %c0_i32_0 = arith.constant 0 : i32
    %c0_i32_1 = arith.constant 0 : i32
    return %c0_i32, %c0_i32_0 : i32, i32
  }
  func.func @transform_7(%arg0: i32) -> (i32, i32, i32) {
    %c0_i32 = arith.constant 0 : i32
    %c0_i32_0 = arith.constant 0 : i32
    %c0_i32_1 = arith.constant 0 : i32
    return %arg0, %c0_i32, %c0_i32_0 : i32, i32, i32
  }
}

</mosaic_0001>

<llo_original>
// kernel: bottleneck_forward.1
$region0: #{bottleneck_forward.1}
  #allocation0 [shape = 'u32[]', space=smem, size = 0x4, offset = 0x4, fixed_abs, tag = 'smem constant byte address 0x4 - core index']
  #allocation1 [shape = 'u32[144,128]{1,0:T(1,128)}', space=vmem, size = 0x12000, scoped, tag = 'internal scratch']
  %s0 = inlined_call_operand.vmem [shape: f32[2,16,128], index: 0, kind: input, shape index: {}]
  %s1 = inlined_call_operand.vmem [shape: bf16[128,128], index: 1, kind: input, shape index: {}]
  %s2 = inlined_call_operand.vmem [shape: bf16[128,144], index: 2, kind: input, shape index: {}]
  %s3 = inlined_call_operand.vmem [shape: bf16[16,128], index: 3, kind: input, shape index: {}]
  %s4 = inlined_call_operand.vmem [shape: bf16[8,8], index: 4, kind: input, shape index: {}]
  %s5 = inlined_call_operand.vmem [shape: bf16[8,128], index: 5, kind: input, shape index: {}]
  %s6 = inlined_call_operand.vmem [shape: f32[17,128], index: 6, kind: input, shape index: {}]
  %s7 = inlined_call_operand.hbm [shape: f32[2,16,128], index: 7, kind: output, shape index: {}]
  %s8 = sld [smem:[#allocation0]]
  $region61: #{bottleneck_forward.1} parent=0
    _
  %s10 = ssub.s32 1, %s8
  %s11 = scalar_select 0, %s10, %s8
  $region1: #{bottleneck_forward.1} parent=0
    #allocation2 [shape = 'u8[16384]{0}', space=vmem, size = 0x4000, scoped, tag = 'output window, operand 0']
    #allocation3 [shape = 's32[2]{0}', space=sflag, size = 0x8, scoped, tag = 'scoped memory for bottleneck_forward.1']
    %12 = vsyncpa [#allocation3], 0
    %s13 = scalar_lea.sflag [#allocation3], 1
    %14 = vsyncpa %s13, 0
    loop: start=0, step=1, limit=4
    $region2: #{bottleneck_forward.1} parent=1 // loop_pre_header
      _
    $region3: #{bottleneck_forward.1} parent=1 // loop_header
      %s16 = sphi 0, %s20
      %p17 = scmp.ge.s32.totalorder %s16, 4
      %s26 = sphi 0, %s28
      %s29 = sphi 0, %s26
      %s30 = sphi 0, %s29
      %s46 = sphi 0, %s30
      %s50 = sphi 0, %s50
      %s52 = sphi 0, %s50
      %s53 = sphi 0, %s52
      %s67 = sphi 0, %s53
      %s71 = sphi 0, %s71
      %s73 = sphi 0, %s71
      %s74 = sphi 0, %s73
      %s88 = sphi 0, %s74
      %s92 = sphi 0, %s92
      %s94 = sphi 0, %s92
      %s95 = sphi 0, %s94
      %s109 = sphi 0, %s95
      %s113 = sphi 0, %s113
      %s115 = sphi 0, %s113
      %s116 = sphi 0, %s115
      %s130 = sphi 0, %s116
      %s134 = sphi 0, %s134
      %s136 = sphi 0, %s134
      %s137 = sphi 0, %s136
      %s151 = sphi 0, %s137
      %s155 = sphi 0, %s155
      %s157 = sphi 0, %s155
      %s158 = sphi 0, %s157
      %s172 = sphi 0, %s158
      %s178 = sphi 0, %s180
      %s181 = sphi 0, %s178
      %s182 = sphi 0, %s181
      %s198 = sphi 0, %s182
    $region4: #{bottleneck_forward.1} parent=1 // loop_header_branch
      %19 = sbr.rel (%p17) target = $region8
    $region5: #{bottleneck_forward.1} parent=1 // loop_body
      %s21 = ssub.s32 %s16, 1
      %s22 = ssub.s32 %s16, 2
      %s23 = sadd.s32 %s16, 1
      %s24 = ssub.s32 %s16, %s23
      %p25 = scmp.eq.s32.totalorder %s24, 0
      %s27 = sadd.s32 %s26, 1
      %s28 = scalar_select %p25, %s26, %s27
      %p31 = pneg %p25
      %p32 = scmp.eq.s32.totalorder %s16, 1
      %p33 = por %p31, %p32
      %p34 = scmp.ne.s32.totalorder %s26, %s29
      %p35 = scmp.eq.s32.totalorder %s16, 0
      %p36 = por %p34, %p35
      %p37 = scmp.ne.s32.totalorder %s26, %s29
      %p38 = scmp.eq.s32.totalorder %s21, 1
      %p39 = por %p37, %p38
      %p40 = scmp.ne.s32.totalorder %s29, %s30
      %p41 = scmp.eq.s32.totalorder %s21, 0
      %p42 = por %p40, %p41
      %p43 = scmp.ne.s32.totalorder %s29, %s30
      %p44 = scmp.eq.s32.totalorder %s22, 1
      %p45 = por %p43, %p44
      %p47 = scmp.ne.s32.totalorder %s30, %s46
      %p48 = scmp.eq.s32.totalorder %s22, 0
      %p49 = por %p47, %p48
      %s51 = sadd.s32 %s50, 1
      %p54 = scmp.eq.s32.totalorder %s16, 1
      %p55 = scmp.ne.s32.totalorder %s50, %s52
      %p56 = scmp.eq.s32.totalorder %s16, 0
      %p57 = por %p55, %p56
      %p58 = scmp.ne.s32.totalorder %s50, %s52
      %p59 = scmp.eq.s32.totalorder %s21, 1
      %p60 = por %p58, %p59
      %p61 = scmp.ne.s32.totalorder %s52, %s53
      %p62 = scmp.eq.s32.totalorder %s21, 0
      %p63 = por %p61, %p62
      %p64 = scmp.ne.s32.totalorder %s52, %s53
      %p65 = scmp.eq.s32.totalorder %s22, 1
      %p66 = por %p64, %p65
      %p68 = scmp.ne.s32.totalorder %s53, %s67
      %p69 = scmp.eq.s32.totalorder %s22, 0
      %p70 = por %p68, %p69
      %s72 = sadd.s32 %s71, 1
      %p75 = scmp.eq.s32.totalorder %s16, 1
      %p76 = scmp.ne.s32.totalorder %s71, %s73
      %p77 = scmp.eq.s32.totalorder %s16, 0
      %p78 = por %p76, %p77
      %p79 = scmp.ne.s32.totalorder %s71, %s73
      %p80 = scmp.eq.s32.totalorder %s21, 1
      %p81 = por %p79, %p80
      %p82 = scmp.ne.s32.totalorder %s73, %s74
      %p83 = scmp.eq.s32.totalorder %s21, 0
      %p84 = por %p82, %p83
      %p85 = scmp.ne.s32.totalorder %s73, %s74
      %p86 = scmp.eq.s32.totalorder %s22, 1
      %p87 = por %p85, %p86
      %p89 = scmp.ne.s32.totalorder %s74, %s88
      %p90 = scmp.eq.s32.totalorder %s22, 0
      %p91 = por %p89, %p90
      %s93 = sadd.s32 %s92, 1
      %p96 = scmp.eq.s32.totalorder %s16, 1
      %p97 = scmp.ne.s32.totalorder %s92, %s94
      %p98 = scmp.eq.s32.totalorder %s16, 0
      %p99 = por %p97, %p98
      %p100 = scmp.ne.s32.totalorder %s92, %s94
      %p101 = scmp.eq.s32.totalorder %s21, 1
      %p102 = por %p100, %p101
      %p103 = scmp.ne.s32.totalorder %s94, %s95
      %p104 = scmp.eq.s32.totalorder %s21, 0
      %p105 = por %p103, %p104
      %p106 = scmp.ne.s32.totalorder %s94, %s95
      %p107 = scmp.eq.s32.totalorder %s22, 1
      %p108 = por %p106, %p107
      %p110 = scmp.ne.s32.totalorder %s95, %s109
      %p111 = scmp.eq.s32.totalorder %s22, 0
      %p112 = por %p110, %p111
      %s114 = sadd.s32 %s113, 1
      %p117 = scmp.eq.s32.totalorder %s16, 1
      %p118 = scmp.ne.s32.totalorder %s113, %s115
      %p119 = scmp.eq.s32.totalorder %s16, 0
      %p120 = por %p118, %p119
      %p121 = scmp.ne.s32.totalorder %s113, %s115
      %p122 = scmp.eq.s32.totalorder %s21, 1
      %p123 = por %p121, %p122
      %p124 = scmp.ne.s32.totalorder %s115, %s116
      %p125 = scmp.eq.s32.totalorder %s21, 0
      %p126 = por %p124, %p125
      %p127 = scmp.ne.s32.totalorder %s115, %s116
      %p128 = scmp.eq.s32.totalorder %s22, 1
      %p129 = por %p127, %p128
      %p131 = scmp.ne.s32.totalorder %s116, %s130
      %p132 = scmp.eq.s32.totalorder %s22, 0
      %p133 = por %p131, %p132
      %s135 = sadd.s32 %s134, 1
      %p138 = scmp.eq.s32.totalorder %s16, 1
      %p139 = scmp.ne.s32.totalorder %s134, %s136
      %p140 = scmp.eq.s32.totalorder %s16, 0
      %p141 = por %p139, %p140
      %p142 = scmp.ne.s32.totalorder %s134, %s136
      %p143 = scmp.eq.s32.totalorder %s21, 1
      %p144 = por %p142, %p143
      %p145 = scmp.ne.s32.totalorder %s136, %s137
      %p146 = scmp.eq.s32.totalorder %s21, 0
      %p147 = por %p145, %p146
      %p148 = scmp.ne.s32.totalorder %s136, %s137
      %p149 = scmp.eq.s32.totalorder %s22, 1
      %p150 = por %p148, %p149
      %p152 = scmp.ne.s32.totalorder %s137, %s151
      %p153 = scmp.eq.s32.totalorder %s22, 0
      %p154 = por %p152, %p153
      %s156 = sadd.s32 %s155, 1
      %p159 = scmp.eq.s32.totalorder %s16, 1
      %p160 = scmp.ne.s32.totalorder %s155, %s157
      %p161 = scmp.eq.s32.totalorder %s16, 0
      %p162 = por %p160, %p161
      %p163 = scmp.ne.s32.totalorder %s155, %s157
      %p164 = scmp.eq.s32.totalorder %s21, 1
      %p165 = por %p163, %p164
      %p166 = scmp.ne.s32.totalorder %s157, %s158
      %p167 = scmp.eq.s32.totalorder %s21, 0
      %p168 = por %p166, %p167
      %p169 = scmp.ne.s32.totalorder %s157, %s158
      %p170 = scmp.eq.s32.totalorder %s22, 1
      %p171 = por %p169, %p170
      %p173 = scmp.ne.s32.totalorder %s158, %s172
      %p174 = scmp.eq.s32.totalorder %s22, 0
      %p175 = por %p173, %p174
      %s176 = ssub.s32 %s16, %s23
      %p177 = scmp.eq.s32.totalorder %s176, 0
      %s179 = sadd.s32 %s178, 1
      %s180 = scalar_select %p177, %s178, %s179
      %p183 = pneg %p177
      %p184 = scmp.eq.s32.totalorder %s16, 1
      %p185 = por %p183, %p184
      %p186 = scmp.ne.s32.totalorder %s178, %s181
      %p187 = scmp.eq.s32.totalorder %s16, 0
      %p188 = por %p186, %p187
      %p189 = scmp.ne.s32.totalorder %s178, %s181
      %p190 = scmp.eq.s32.totalorder %s21, 1
      %p191 = por %p189, %p190
      %p192 = scmp.ne.s32.totalorder %s181, %s182
      %p193 = scmp.eq.s32.totalorder %s21, 0
      %p194 = por %p192, %p193
      %p195 = scmp.ne.s32.totalorder %s181, %s182
      %p196 = scmp.eq.s32.totalorder %s22, 1
      %p197 = por %p195, %p196
      %p199 = scmp.ne.s32.totalorder %s182, %s198
      %p200 = scmp.eq.s32.totalorder %s22, 0
      %p201 = por %p199, %p200
      %p202 = scmp.le.s32.totalorder 1, %s16
      %p203 = scmp.lt.s32.totalorder %s16, 3
      %p204 = pnand %p202, %p203
      %p205 = pneg %p204
      // Predicated region
      $region9: #{bottleneck_forward.1} parent=5 // pred_check
        _
      $region10: #{bottleneck_forward.1} parent=5 // pred_check_branch
        %207 = sbr.rel (%p204) target = $region12
      $region11: #{bottleneck_forward.1} parent=5 // pred_region
        %s208 = ssub.s32 %s16, 1
        // Predicated region
        $region13: #{bottleneck_forward.1} parent=11 // pred_check
          %p209 = pneg %p63
        $region14: #{bottleneck_forward.1} parent=11 // pred_check_branch
          %211 = sbr.rel (%p209) target = $region16
        $region15: #{bottleneck_forward.1} parent=11 // pred_region
          _
        $region16: #{bottleneck_forward.1} parent=11 // pred_fallthru
          _
        // Predicated region
        $region17: #{bottleneck_forward.1} parent=11 // pred_check
          %p212 = pneg %p84
        $region18: #{bottleneck_forward.1} parent=11 // pred_check_branch
          %214 = sbr.rel (%p212) target = $region20
        $region19: #{bottleneck_forward.1} parent=11 // pred_region
          _
        $region20: #{bottleneck_forward.1} parent=11 // pred_fallthru
          _
        // Predicated region
        $region21: #{bottleneck_forward.1} parent=11 // pred_check
          %p215 = pneg %p105
        $region22: #{bottleneck_forward.1} parent=11 // pred_check_branch
          %217 = sbr.rel (%p215) target = $region24
        $region23: #{bottleneck_forward.1} parent=11 // pred_region
          _
        $region24: #{bottleneck_forward.1} parent=11 // pred_fallthru
          _
        // Predicated region
        $region25: #{bottleneck_forward.1} parent=11 // pred_check
          %p218 = pneg %p126
        $region26: #{bottleneck_forward.1} parent=11 // pred_check_branch
          %220 = sbr.rel (%p218) target = $region28
        $region27: #{bottleneck_forward.1} parent=11 // pred_region
          _
        $region28: #{bottleneck_forward.1} parent=11 // pred_fallthru
          _
        // Predicated region
        $region29: #{bottleneck_forward.1} parent=11 // pred_check
          %p221 = pneg %p147
        $region30: #{bottleneck_forward.1} parent=11 // pred_check_branch
          %223 = sbr.rel (%p221) target = $region32
        $region31: #{bottleneck_forward.1} parent=11 // pred_region
          _
        $region32: #{bottleneck_forward.1} parent=11 // pred_fallthru
          _
        // Predicated region
        $region33: #{bottleneck_forward.1} parent=11 // pred_check
          %p224 = pneg %p168
        $region34: #{bottleneck_forward.1} parent=11 // pred_check_branch
          %226 = sbr.rel (%p224) target = $region36
        $region35: #{bottleneck_forward.1} parent=11 // pred_region
          _
        $region36: #{bottleneck_forward.1} parent=11 // pred_fallthru
          _
      $region12: #{bottleneck_forward.1} parent=5 // pred_fallthru
        _
      %p227 = scmp.lt.s32.totalorder %s16, 2
      // Predicated region
      $region37: #{bottleneck_forward.1} parent=5 // pred_check
        %p228 = pneg %p227
      $region38: #{bottleneck_forward.1} parent=5 // pred_check_branch
        %230 = sbr.rel (%p228) target = $region40
      $region39: #{bottleneck_forward.1} parent=5 // pred_region
        // Predicated region
        $region41: #{bottleneck_forward.1} parent=39 // pred_check
          %p231 = pneg %p36
        $region42: #{bottleneck_forward.1} parent=39 // pred_check_branch
          %233 = sbr.rel (%p231) target = $region44
        $region43: #{bottleneck_forward.1} parent=39 // pred_region
          %p234 = scmp.lt.s32.totalorder %s16, 1
          %s235 = scalar_select %p234, %s16, 1
          %s236 = smul.addr %s235, 2
          %s237 = smul.addr %s236, 8
          %s238 = scalar_lea.vmem %s0, %s237
        $region44: #{bottleneck_forward.1} parent=39 // pred_fallthru
          _
      $region40: #{bottleneck_forward.1} parent=5 // pred_fallthru
        _
      %p239 = scmp.le.s32.totalorder 1, %s16
      %p240 = scmp.lt.s32.totalorder %s16, 3
      %p241 = pnand %p239, %p240
      %p242 = pneg %p241
      // Predicated region
      $region45: #{bottleneck_forward.1} parent=5 // pred_check
        _
      $region46: #{bottleneck_forward.1} parent=5 // pred_check_branch
        %244 = sbr.rel (%p241) target = $region48
      $region47: #{bottleneck_forward.1} parent=5 // pred_region
        %s245 = ssub.s32 %s16, 1
        %p246 = scmp.lt.s32.totalorder %s21, 1
        %s247 = scalar_select %p246, %s21, 1
        %s248 = smul.addr %s247, 2
        %s249 = smul.addr %s248, 8
        %s250 = scalar_lea.vmem %s0, %s249
        %p251 = pneg %p42
        %p252 = pneg %p39
        %p253 = pneg %p63
        %p254 = pneg %p60
        %p255 = pneg %p84
        %p256 = pneg %p81
        %p257 = pneg %p105
        %p258 = pneg %p102
        %p259 = pneg %p126
        %p260 = pneg %p123
        %p261 = pneg %p147
        %p262 = pneg %p144
        %p263 = pneg %p168
        %p264 = pneg %p165
        %p265 = pneg %p194
        %p266 = pneg %p191
        %s267 = sand.u32 %s181, 1
        %s268 = scalar_lea.sflag [#allocation3], %s267
        %s269 = sand.u32 %s181, 1
        %s270 = smul.addr %s269, 16
        %s271 = scalar_lea.vmem [#allocation2], %s270
        %p272 = scmp.lt.s32.totalorder %s21, 1
        %s273 = scalar_select %p272, %s21, 1
        %s274 = smul.addr %s273, 2
        %s275 = smul.addr %s274, 8
        %s276 = scalar_lea.vmem %s0, %s275
        %v278 = vld [vmem:[%s6] sm:$0xff]
        %v279 = vld [vmem:[%s6 + $0x8] sm:$0xff]
        %v280 = vld [vmem:[%s6 + $0x10] sm:$0x1]
        %v281 = vld [vmem:[%s276] sm:$0xff]
        %v282 = vld [vmem:[%s276 + $0x8] sm:$0xff]
        %v283 = vpack.c.bf16 %v282, %v281
        %v284 = vld [vmem:[%s1] sm:$0xf]
        %v285 = vld [vmem:[%s1 + $0x4] sm:$0xf]
        %v286 = vld [vmem:[%s1 + $0x8] sm:$0xf]
        %v287 = vld [vmem:[%s1 + $0xc] sm:$0xf]
        %v288 = vld [vmem:[%s1 + $0x10] sm:$0xf]
        %v289 = vld [vmem:[%s1 + $0x14] sm:$0xf]
        %v290 = vld [vmem:[%s1 + $0x18] sm:$0xf]
        %v291 = vld [vmem:[%s1 + $0x1c] sm:$0xf]
        %v292 = vld [vmem:[%s1 + $0x20] sm:$0xf]
        %v293 = vld [vmem:[%s1 + $0x24] sm:$0xf]
        %v294 = vld [vmem:[%s1 + $0x28] sm:$0xf]
        %v295 = vld [vmem:[%s1 + $0x2c] sm:$0xf]
        %v296 = vld [vmem:[%s1 + $0x30] sm:$0xf]
        %v297 = vld [vmem:[%s1 + $0x34] sm:$0xf]
        %v298 = vld [vmem:[%s1 + $0x38] sm:$0xf]
        %v299 = vld [vmem:[%s1 + $0x3c] sm:$0xf]
        %v300 = vlaneseq
        %v301 = vshrl.u32 %v300, 7
        %v302 = vsub.s32 1, %v301
        %v303 = vrot.slane %v279, %v302
        %v320 = vunpack.c.l.b16 %v284
        %v321 = vunpack.c.l.b16 %v285
        %v322 = vunpack.c.l.b16 %v286
        %v323 = vunpack.c.l.b16 %v287
        %v324 = vunpack.c.l.b16 %v288
        %v325 = vunpack.c.l.b16 %v289
        %v326 = vunpack.c.l.b16 %v290
        %v327 = vunpack.c.l.b16 %v291
        %v328 = vunpack.c.l.b16 %v292
        %v329 = vunpack.c.l.b16 %v293
        %v330 = vunpack.c.l.b16 %v294
        %v331 = vunpack.c.l.b16 %v295
        %v332 = vunpack.c.l.b16 %v296
        %v333 = vunpack.c.l.b16 %v297
        %v334 = vunpack.c.l.b16 %v298
        %v335 = vunpack.c.l.b16 %v299
        %v336 = vpack.c.b16 %v321, %v320
        %v337 = vpack.c.b16 %v323, %v322
        %v338 = vpack.c.b16 %v325, %v324
        %v339 = vpack.c.b16 %v327, %v326
        %v340 = vpack.c.b16 %v329, %v328
        %v341 = vpack.c.b16 %v331, %v330
        %v342 = vpack.c.b16 %v333, %v332
        %v343 = vpack.c.b16 %v335, %v334
        %352 = vmatprep.subr.bf16.mxu0 0
        %353 = vmatpush1.bf16.msra.mxu0 %v336
        %354 = vmatprep.subr.bf16.mxu0 0
        %355 = vmatpush1.bf16.msra.mxu0 %v337
        %356 = vmatprep.subr.bf16.mxu0 0
        %357 = vmatpush1.bf16.msra.mxu0 %v338
        %358 = vmatprep.subr.bf16.mxu0 0
        %359 = vmatpush1.bf16.msra.mxu0 %v339
        %360 = vmatprep.subr.bf16.mxu0 0
        %361 = vmatpush1.bf16.msra.mxu0 %v340
        %362 = vmatprep.subr.bf16.mxu0 0
        %363 = vmatpush1.bf16.msra.mxu0 %v341
        %364 = vmatprep.subr.bf16.mxu0 0
        %365 = vmatpush1.bf16.msra.mxu0 %v342
        %366 = vmatprep.subr.bf16.mxu0 0
        %367 = vmatpush1.bf16.msra.mxu0 %v343
        %368 = vmatprep.subr.bf16.mxu0 0
        %369 = vmatpush1.bf16.msra.mxu0 0
        %370 = vmatprep.subr.bf16.mxu0 0
        %371 = vmatpush1.bf16.msra.mxu0 0
        %372 = vmatprep.subr.bf16.mxu0 0
        %373 = vmatpush1.bf16.msra.mxu0 0
        %374 = vmatprep.subr.bf16.mxu0 0
        %375 = vmatpush1.bf16.msra.mxu0 0
        %376 = vmatprep.subr.bf16.mxu0 0
        %377 = vmatpush1.bf16.msra.mxu0 0
        %378 = vmatprep.subr.bf16.mxu0 0
        %379 = vmatpush1.bf16.msra.mxu0 0
        %380 = vmatprep.subr.bf16.mxu0 0
        %381 = vmatpush1.bf16.msra.mxu0 0
        %382 = vmatprep.subr.bf16.mxu0 0
        %383 = vmatpush1.bf16.msra.mxu0 0
        %384 = vmatprep.mubr.bf16.mxu0 0
        %385 = vmatmul.mubr.bf16.gmra.mrb[0].mxu0 %v283
        %v386 = vpop.f32.mrb[0].mxu0
        %v387 = vadd.f32 %v303, %v386
        %v388 = vpop.f32.mrb[0].mxu0
        %v389 = vpop.f32.mrb[0].mxu0
        %v390 = vadd.f32 %v303, %v389
        %v391 = vpop.f32.mrb[0].mxu0
        %392 = vdwg.mxu0
        %v393 = vmax.f32 %v387, 0.0
        %v394 = vmax.f32 %v390, 0.0
        %v395 = vlaneseq
        %v396 = vshrl.u32 %v395, 7
        %v397 = vadd.s32 %v396, 8
        %vm398 = vcmp.gt.s32.totalorder %v396, 0
        %vm399 = vcmp.gt.s32.totalorder %v397, 0
        %v400 = vrot.slane %v393, 7
        %v401 = vrot.slane %v394, 7
        %vm402 = vcmp.lt.s32.totalorder %v396, 1
        %v403 = vsel %vm402, %v400, %v401
        %v404 = vsel %vm402, %v401, %v400
        %v405 = vsel %vm398, %v404, 0.0
        %v406 = vsel %vm399, %v403, 0.0
        %vm407 = vcmp.lt.s32.totalorder %v396, 15
        %vm408 = vcmp.lt.s32.totalorder %v397, 15
        %v409 = vrot.slane %v393, 1
        %v410 = vrot.slane %v394, 1
        %vm411 = vcmp.lt.s32.totalorder %v396, 7
        %v412 = vsel %vm411, %v409, %v410
        %v413 = vsel %vm411, %v410, %v409
        %v414 = vsel %vm407, %v412, 0.0
        %v415 = vsel %vm408, %v413, 0.0
        %416 = vrot.lane.b32.xlu0 %v405, 8
        %v417 = vpop.permute.xlu0 %416
        %418 = vrot.lane.b32.xlu0 %v406, 8
        %v419 = vpop.permute.xlu0 %418
        %v420 = vlaneseq
        %v421 = vshrl.u32 %v420, 7
        %v422 = vsub.s32 0, %v421
        %v423 = vrot.slane %v278, %v422
        %v424 = vmul.f32 %v423, %v417
        %v425 = vmul.f32 %v423, %v419
        %v426 = vlaneseq
        %v427 = vshrl.u32 %v426, 7
        %v428 = vsub.s32 1, %v427
        %v429 = vrot.slane %v278, %v428
        %v430 = vmul.f32 %v429, %v405
        %v431 = vmul.f32 %v429, %v406
        %v432 = vadd.f32 %v424, %v430
        %v433 = vadd.f32 %v425, %v431
        %434 = vrot.lane.b32.xlu0 %v405, 120
        %v435 = vpop.permute.xlu0 %434
        %436 = vrot.lane.b32.xlu0 %v406, 120
        %v437 = vpop.permute.xlu0 %436
        %v438 = vlaneseq
        %v439 = vshrl.u32 %v438, 7
        %v440 = vsub.s32 2, %v439
        %v441 = vrot.slane %v278, %v440
        %v442 = vmul.f32 %v441, %v435
        %v443 = vmul.f32 %v441, %v437
        %v444 = vadd.f32 %v432, %v442
        %v445 = vadd.f32 %v433, %v443
        %446 = vrot.lane.b32.xlu0 %v393, 8
        %v447 = vpop.permute.xlu0 %446
        %448 = vrot.lane.b32.xlu0 %v394, 8
        %v449 = vpop.permute.xlu0 %448
        %v450 = vlaneseq
        %v451 = vshrl.u32 %v450, 7
        %v452 = vsub.s32 3, %v451
        %v453 = vrot.slane %v278, %v452
        %v454 = vmul.f32 %v453, %v447
        %v455 = vmul.f32 %v453, %v449
        %v456 = vlaneseq
        %v457 = vshrl.u32 %v456, 7
        %v458 = vsub.s32 4, %v457
        %v459 = vrot.slane %v278, %v458
        %v460 = vmul.f32 %v459, %v393
        %v461 = vmul.f32 %v459, %v394
        %v462 = vadd.f32 %v454, %v460
        %v463 = vadd.f32 %v455, %v461
        %464 = vrot.lane.b32.xlu0 %v393, 120
        %v465 = vpop.permute.xlu0 %464
        %466 = vrot.lane.b32.xlu0 %v394, 120
        %v467 = vpop.permute.xlu0 %466
        %v468 = vlaneseq
        %v469 = vshrl.u32 %v468, 7
        %v470 = vsub.s32 5, %v469
        %v471 = vrot.slane %v278, %v470
        %v472 = vmul.f32 %v471, %v465
        %v473 = vmul.f32 %v471, %v467
        %v474 = vadd.f32 %v462, %v472
        %v475 = vadd.f32 %v463, %v473
        %v476 = vadd.f32 %v444, %v474
        %v477 = vadd.f32 %v445, %v475
        %478 = vrot.lane.b32.xlu0 %v414, 8
        %v479 = vpop.permute.xlu0 %478
        %480 = vrot.lane.b32.xlu0 %v415, 8
        %v481 = vpop.permute.xlu0 %480
        %v482 = vlaneseq
        %v483 = vshrl.u32 %v482, 7
        %v484 = vsub.s32 6, %v483
        %v485 = vrot.slane %v278, %v484
        %v486 = vmul.f32 %v485, %v479
        %v487 = vmul.f32 %v485, %v481
        %v488 = vlaneseq
        %v489 = vshrl.u32 %v488, 7
        %v490 = vsub.s32 7, %v489
        %v491 = vrot.slane %v278, %v490
        %v492 = vmul.f32 %v491, %v414
        %v493 = vmul.f32 %v491, %v415
        %v494 = vadd.f32 %v486, %v492
        %v495 = vadd.f32 %v487, %v493
        %496 = vrot.lane.b32.xlu0 %v414, 120
        %v497 = vpop.permute.xlu0 %496
        %498 = vrot.lane.b32.xlu0 %v415, 120
        %v499 = vpop.permute.xlu0 %498
        %v500 = vlaneseq
        %v501 = vshrl.u32 %v500, 7
        %v502 = vsub.s32 0, %v501
        %v503 = vrot.slane %v279, %v502
        %v504 = vmul.f32 %v503, %v497
        %v505 = vmul.f32 %v503, %v499
        %v506 = vadd.f32 %v494, %v504
        %v507 = vadd.f32 %v495, %v505
        %v508 = vadd.f32 %v476, %v506
        %v509 = vadd.f32 %v477, %v507
        %v510 = vlaneseq
        %v511 = vshrl.u32 %v510, 7
        %v512 = vsub.s32 2, %v511
        %v513 = vrot.slane %v279, %v512
        %v514 = vadd.f32 %v508, %v513
        %v515 = vadd.f32 %v509, %v513
        %v516 = vmax.f32 %v514, 0.0
        %v517 = vmax.f32 %v515, 0.0
        %v518 = vpack.c.bf16 %v517, %v516
        %v519 = vld [vmem:[%s2] sm:$0xff]
        %v520 = vld [vmem:[%s2 + $0x8] sm:$0xff]
        %v521 = vld [vmem:[%s2 + $0x10] sm:$0xff]
        %v522 = vld [vmem:[%s2 + $0x18] sm:$0xff]
        %v523 = vld [vmem:[%s2 + $0x20] sm:$0xff]
        %v524 = vld [vmem:[%s2 + $0x28] sm:$0xff]
        %v525 = vld [vmem:[%s2 + $0x30] sm:$0xff]
        %v526 = vld [vmem:[%s2 + $0x38] sm:$0xff]
        %v527 = vld [vmem:[%s2 + $0x40] sm:$0xff]
        %v528 = vld [vmem:[%s2 + $0x48] sm:$0xff]
        %v529 = vld [vmem:[%s2 + $0x50] sm:$0xff]
        %v530 = vld [vmem:[%s2 + $0x58] sm:$0xff]
        %v531 = vld [vmem:[%s2 + $0x60] sm:$0xff]
        %v532 = vld [vmem:[%s2 + $0x68] sm:$0xff]
        %v533 = vld [vmem:[%s2 + $0x70] sm:$0xff]
        %v534 = vld [vmem:[%s2 + $0x78] sm:$0xff]
        %v551 = vunpack.c.l.b16 %v519
        %v552 = vunpack.c.h.b16 %v519
        %v553 = vunpack.c.l.b16 %v520
        %v554 = vunpack.c.h.b16 %v520
        %v555 = vunpack.c.l.b16 %v521
        %v556 = vunpack.c.h.b16 %v521
        %v557 = vunpack.c.l.b16 %v522
        %v558 = vunpack.c.h.b16 %v522
        %v559 = vunpack.c.l.b16 %v523
        %v560 = vunpack.c.h.b16 %v523
        %v561 = vunpack.c.l.b16 %v524
        %v562 = vunpack.c.h.b16 %v524
        %v563 = vunpack.c.l.b16 %v525
        %v564 = vunpack.c.h.b16 %v525
        %v565 = vunpack.c.l.b16 %v526
        %v566 = vunpack.c.h.b16 %v526
        %v567 = vunpack.c.l.b16 %v527
        %v568 = vunpack.c.h.b16 %v527
        %v569 = vunpack.c.l.b16 %v528
        %v570 = vunpack.c.h.b16 %v528
        %v571 = vunpack.c.l.b16 %v529
        %v572 = vunpack.c.h.b16 %v529
        %v573 = vunpack.c.l.b16 %v530
        %v574 = vunpack.c.h.b16 %v530
        %v575 = vunpack.c.l.b16 %v531
        %v576 = vunpack.c.h.b16 %v531
        %v577 = vunpack.c.l.b16 %v532
        %v578 = vunpack.c.h.b16 %v532
        %v579 = vunpack.c.l.b16 %v533
        %v580 = vunpack.c.h.b16 %v533
        %v581 = vunpack.c.l.b16 %v534
        %v582 = vunpack.c.h.b16 %v534
        %v583 = vpack.c.b16 %v553, %v551
        %v584 = vpack.c.b16 %v554, %v552
        %v585 = vpack.c.b16 %v557, %v555
        %v586 = vpack.c.b16 %v558, %v556
        %v587 = vpack.c.b16 %v561, %v559
        %v588 = vpack.c.b16 %v562, %v560
        %v589 = vpack.c.b16 %v565, %v563
        %v590 = vpack.c.b16 %v566, %v564
        %v591 = vpack.c.b16 %v569, %v567
        %v592 = vpack.c.b16 %v570, %v568
        %v593 = vpack.c.b16 %v573, %v571
        %v594 = vpack.c.b16 %v574, %v572
        %v595 = vpack.c.b16 %v577, %v575
        %v596 = vpack.c.b16 %v578, %v576
        %v597 = vpack.c.b16 %v581, %v579
        %v598 = vpack.c.b16 %v582, %v580
        %615 = vmatprep.subr.bf16.mxu0 %v584
        %616 = vmatpush1.bf16.msra.mxu0 %v583
        %617 = vmatprep.subr.bf16.mxu0 %v586
        %618 = vmatpush1.bf16.msra.mxu0 %v585
        %619 = vmatprep.subr.bf16.mxu0 %v588
        %620 = vmatpush1.bf16.msra.mxu0 %v587
        %621 = vmatprep.subr.bf16.mxu0 %v590
        %622 = vmatpush1.bf16.msra.mxu0 %v589
        %623 = vmatprep.subr.bf16.mxu0 %v592
        %624 = vmatpush1.bf16.msra.mxu0 %v591
        %625 = vmatprep.subr.bf16.mxu0 %v594
        %626 = vmatpush1.bf16.msra.mxu0 %v593
        %627 = vmatprep.subr.bf16.mxu0 %v596
        %628 = vmatpush1.bf16.msra.mxu0 %v595
        %629 = vmatprep.subr.bf16.mxu0 %v598
        %630 = vmatpush1.bf16.msra.mxu0 %v597
        %631 = vmatprep.subr.bf16.mxu0 0
        %632 = vmatpush1.bf16.msra.mxu0 0
        %633 = vmatprep.subr.bf16.mxu0 0
        %634 = vmatpush1.bf16.msra.mxu0 0
        %635 = vmatprep.subr.bf16.mxu0 0
        %636 = vmatpush1.bf16.msra.mxu0 0
        %637 = vmatprep.subr.bf16.mxu0 0
        %638 = vmatpush1.bf16.msra.mxu0 0
        %639 = vmatprep.subr.bf16.mxu0 0
        %640 = vmatpush1.bf16.msra.mxu0 0
        %641 = vmatprep.subr.bf16.mxu0 0
        %642 = vmatpush1.bf16.msra.mxu0 0
        %643 = vmatprep.subr.bf16.mxu0 0
        %644 = vmatpush1.bf16.msra.mxu0 0
        %645 = vmatprep.subr.bf16.mxu0 0
        %646 = vmatpush1.bf16.msra.mxu0 0
        %647 = vmatprep.mubr.bf16.mxu0 0
        %648 = vmatmul.mubr.bf16.gmra.mrb[0].mxu0 %v518
        %v649 = vpop.f32.mrb[0].mxu0
        %v650 = vadd.f32 0.0, %v649
        %v651 = vpop.f32.mrb[0].mxu0
        %v652 = vadd.f32 0.0, %v651
        %v653 = vpop.f32.mrb[0].mxu0
        %v654 = vadd.f32 0.0, %v653
        %v655 = vpop.f32.mrb[0].mxu0
        %v656 = vadd.f32 0.0, %v655
        %657 = vdwg.mxu0
        %v658 = vlaneseq
        %v659 = vshrl.u32 %v658, 7
        %v660 = vsub.s32 3, %v659
        %v661 = vrot.slane %v279, %v660
        %v662 = vadd.f32 %v650, %v661
        %v663 = vadd.f32 %v654, %v661
        %v664 = vlaneseq
        %v665 = vshrl.u32 %v664, 7
        %v666 = vsub.s32 4, %v665
        %v667 = vrot.slane %v279, %v666
        %v668 = vadd.f32 %v652, %v667
        %v669 = vadd.f32 %v656, %v667
        %vm670 = vcmask 130048
        %v671 = vsel %vm670, %v668, -inf
        %672 = vmax.xlane.f32.xlu0 %v671
        %v673 = vpop.xlane.xlu0 %672
        %v674 = vsel %vm670, %v669, -inf
        %675 = vmax.xlane.f32.xlu0 %v674
        %v676 = vpop.xlane.xlu0 %675
        %v677 = vmax.f32 %v673, %v676
        %v678 = vrot.slane %v677, 4
        %v679 = vmax.f32 %v677, %v678
        %v680 = vrot.slane %v679, 2
        %v681 = vmax.f32 %v679, %v680
        %v682 = vrot.slane %v681, 1
        %v683 = vmax.f32 %v681, %v682
        %v684 = vsub.f32 %v668, %v683
        %v685 = vsub.f32 %v669, %v683
        %v686 = vmul.f32 %v684, 1.442695
        %v687 = vpow.pop %v686
        %v688 = vmul.f32 %v685, 1.442695
        %v689 = vpow.pop %v688
        %v690 = vsel %vm670, %v687, 0.0
        %691 = vadd.xlane.f32.xlu0 %v690
        %v692 = vpop.xlane.xlu0 %691
        %v693 = vsel %vm670, %v689, 0.0
        %694 = vadd.xlane.f32.xlu0 %v693
        %v695 = vpop.xlane.xlu0 %694
        %v696 = vadd.f32 %v692, %v695
        %v697 = vrot.slane %v696, 4
        %v698 = vadd.f32 %v696, %v697
        %v699 = vrot.slane %v698, 2
        %v700 = vadd.f32 %v698, %v699
        %v701 = vrot.slane %v700, 1
        %v702 = vadd.f32 %v700, %v701
        %v703 = vrcp.pop %v702
        %v704 = vmul.f32 %v687, %v703
        %v705 = vmul.f32 %v689, %v703
        %v706 = vpack.c.bf16 %v705, %v704
        %v707 = vld [vmem:[%s3] sm:$0xf]
        %v708 = vld [vmem:[%s3 + $0x4] sm:$0xf]
        %v711 = vunpack.c.l.b16 %v707
        %v712 = vunpack.c.l.b16 %v708
        %v713 = vpack.c.b16 %v712, %v711
        %v716 = vsel %vm670, %v706, 0
        %718 = vmatprep.subr.bf16.mxu0 0
        %719 = vmatpush1.bf16.msra.mxu0 %v713
        %720 = vmatprep.subr.bf16.mxu0 0
        %721 = vmatpush1.bf16.msra.mxu0 0
        %722 = vmatprep.subr.bf16.mxu0 0
        %723 = vmatpush1.bf16.msra.mxu0 0
        %724 = vmatprep.subr.bf16.mxu0 0
        %725 = vmatpush1.bf16.msra.mxu0 0
        %726 = vmatprep.subr.bf16.mxu0 0
        %727 = vmatpush1.bf16.msra.mxu0 0
        %728 = vmatprep.subr.bf16.mxu0 0
        %729 = vmatpush1.bf16.msra.mxu0 0
        %730 = vmatprep.subr.bf16.mxu0 0
        %731 = vmatpush1.bf16.msra.mxu0 0
        %732 = vmatprep.subr.bf16.mxu0 0
        %733 = vmatpush1.bf16.msra.mxu0 0
        %734 = vmatprep.subr.bf16.mxu0 0
        %735 = vmatpush1.bf16.msra.mxu0 0
        %736 = vmatprep.subr.bf16.mxu0 0
        %737 = vmatpush1.bf16.msra.mxu0 0
        %738 = vmatprep.subr.bf16.mxu0 0
        %739 = vmatpush1.bf16.msra.mxu0 0
        %740 = vmatprep.subr.bf16.mxu0 0
        %741 = vmatpush1.bf16.msra.mxu0 0
        %742 = vmatprep.subr.bf16.mxu0 0
        %743 = vmatpush1.bf16.msra.mxu0 0
        %744 = vmatprep.subr.bf16.mxu0 0
        %745 = vmatpush1.bf16.msra.mxu0 0
        %746 = vmatprep.subr.bf16.mxu0 0
        %747 = vmatpush1.bf16.msra.mxu0 0
        %748 = vmatprep.subr.bf16.mxu0 0
        %749 = vmatpush1.bf16.msra.mxu0 0
        %750 = vmatprep.mubr.bf16.mxu0 0
        %751 = vmatmul.mubr.bf16.gmra.mrb[0].mxu0 %v716
        %v752 = vpop.f32.mrb[0].mxu0
        %v753 = vadd.f32 0.0, %v752
        %v754 = vpop.f32.mrb[0].mxu0
        %v755 = vpop.f32.mrb[0].mxu0
        %v756 = vadd.f32 0.0, %v755
        %v757 = vpop.f32.mrb[0].mxu0
        %758 = vdwg.mxu0
        %v759 = vmul.f32 %v753, %v662
        %v760 = vmul.f32 %v756, %v663
        %v761 = vadd.f32 %v759, %v760
        %v762 = vrot.slane %v761, 4
        %v763 = vadd.f32 %v761, %v762
        %v764 = vrot.slane %v763, 2
        %v765 = vadd.f32 %v763, %v764
        %v766 = vrot.slane %v765, 1
        %v767 = vadd.f32 %v765, %v766
        %768 = vrot.lane.b32.xlu0 %v767, 64
        %v769 = vpop.permute.xlu0 %768
        %v770 = vadd.f32 %v767, %v769
        %771 = vrot.lane.b32.xlu0 %v770, 96
        %v772 = vpop.permute.xlu0 %771
        %v773 = vadd.f32 %v770, %v772
        %774 = vrot.lane.b32.xlu0 %v773, 112
        %v775 = vpop.permute.xlu0 %774
        %v776 = vadd.f32 %v773, %v775
        %777 = vrot.lane.b32.xlu0 %v776, 120
        %v778 = vpop.permute.xlu0 %777
        %v779 = vadd.f32 %v776, %v778
        %v780 = vpack.c.bf16 %v779, %v779
        %v781 = vld [vmem:[%s4] sm:$0xf]
        %v783 = vrot.slane %v279, 5
        %vm785 = vcmask 64512
        %v787 = vsel %vm785, %v780, 0
        %vm789 = vcmask 1043456
        %v791 = vsel %vm789, %v781, 0
        %793 = vmatprep.subr.bf16.mxu0 0
        %794 = vmatpush1.bf16.msra.mxu0 %v791
        %795 = vmatprep.subr.bf16.mxu0 0
        %796 = vmatpush1.bf16.msra.mxu0 0
        %797 = vmatprep.subr.bf16.mxu0 0
        %798 = vmatpush1.bf16.msra.mxu0 0
        %799 = vmatprep.subr.bf16.mxu0 0
        %800 = vmatpush1.bf16.msra.mxu0 0
        %801 = vmatprep.subr.bf16.mxu0 0
        %802 = vmatpush1.bf16.msra.mxu0 0
        %803 = vmatprep.subr.bf16.mxu0 0
        %804 = vmatpush1.bf16.msra.mxu0 0
        %805 = vmatprep.subr.bf16.mxu0 0
        %806 = vmatpush1.bf16.msra.mxu0 0
        %807 = vmatprep.subr.bf16.mxu0 0
        %808 = vmatpush1.bf16.msra.mxu0 0
        %809 = vmatprep.subr.bf16.mxu0 0
        %810 = vmatpush1.bf16.msra.mxu0 0
        %811 = vmatprep.subr.bf16.mxu0 0
        %812 = vmatpush1.bf16.msra.mxu0 0
        %813 = vmatprep.subr.bf16.mxu0 0
        %814 = vmatpush1.bf16.msra.mxu0 0
        %815 = vmatprep.subr.bf16.mxu0 0
        %816 = vmatpush1.bf16.msra.mxu0 0
        %817 = vmatprep.subr.bf16.mxu0 0
        %818 = vmatpush1.bf16.msra.mxu0 0
        %819 = vmatprep.subr.bf16.mxu0 0
        %820 = vmatpush1.bf16.msra.mxu0 0
        %821 = vmatprep.subr.bf16.mxu0 0
        %822 = vmatpush1.bf16.msra.mxu0 0
        %823 = vmatprep.subr.bf16.mxu0 0
        %824 = vmatpush1.bf16.msra.mxu0 0
        %825 = vmatprep.mubr.bf16.mxu0 0
        %826 = vmatmul.mubr.bf16.gmra.mrb[0].mxu0 %v787
        %v827 = vpop.f32.mrb[0].mxu0
        %v828 = vadd.f32 %v783, %v827
        %v829 = vpop.f32.mrb[0].mxu0
        %v830 = vpop.f32.mrb[0].mxu0
        %v831 = vpop.f32.mrb[0].mxu0
        %832 = vdwg.mxu0
        %vm833 = vcmask 57344
        %v834 = vsel %vm833, %v828, 0.0
        %835 = vadd.xlane.f32.xlu0 %v834
        %v836 = vpop.xlane.xlu0 %835
        %v837 = vrcp.pop 8.0
        %v838 = vmul.f32 %v836, %v837
        %v839 = vsub.f32 %v828, %v838
        %v840 = vmul.f32 %v839, %v839
        %v841 = vsel %vm833, %v840, 0.0
        %842 = vadd.xlane.f32.xlu0 %v841
        %v843 = vpop.xlane.xlu0 %842
        %v844 = vmul.f32 %v843, %v837
        %v845 = vadd.f32 %v844, 1e-05
        %v846 = vrsqrt.pop %v845
        %v847 = vmul.f32 %v839, %v846
        %v848 = vrot.slane %v279, 6
        %v850 = vmul.f32 %v847, %v848
        %v851 = vrot.slane %v279, 7
        %v853 = vadd.f32 %v850, %v851
        %v854 = vmax.f32 %v853, 0.0
        %v855 = vpack.c.bf16 %v854, %v854
        %v856 = vld [vmem:[%s5] sm:$0xf]
        %v858 = vsel %vm785, %v855, 0
        %v861 = vsel %vm789, %v856, 0
        %863 = vmatprep.subr.bf16.mxu0 0
        %864 = vmatpush1.bf16.msra.mxu0 %v861
        %865 = vmatprep.subr.bf16.mxu0 0
        %866 = vmatpush1.bf16.msra.mxu0 0
        %867 = vmatprep.subr.bf16.mxu0 0
        %868 = vmatpush1.bf16.msra.mxu0 0
        %869 = vmatprep.subr.bf16.mxu0 0
        %870 = vmatpush1.bf16.msra.mxu0 0
        %871 = vmatprep.subr.bf16.mxu0 0
        %872 = vmatpush1.bf16.msra.mxu0 0
        %873 = vmatprep.subr.bf16.mxu0 0
        %874 = vmatpush1.bf16.msra.mxu0 0
        %875 = vmatprep.subr.bf16.mxu0 0
        %876 = vmatpush1.bf16.msra.mxu0 0
        %877 = vmatprep.subr.bf16.mxu0 0
        %878 = vmatpush1.bf16.msra.mxu0 0
        %879 = vmatprep.subr.bf16.mxu0 0
        %880 = vmatpush1.bf16.msra.mxu0 0
        %881 = vmatprep.subr.bf16.mxu0 0
        %882 = vmatpush1.bf16.msra.mxu0 0
        %883 = vmatprep.subr.bf16.mxu0 0
        %884 = vmatpush1.bf16.msra.mxu0 0
        %885 = vmatprep.subr.bf16.mxu0 0
        %886 = vmatpush1.bf16.msra.mxu0 0
        %887 = vmatprep.subr.bf16.mxu0 0
        %888 = vmatpush1.bf16.msra.mxu0 0
        %889 = vmatprep.subr.bf16.mxu0 0
        %890 = vmatpush1.bf16.msra.mxu0 0
        %891 = vmatprep.subr.bf16.mxu0 0
        %892 = vmatpush1.bf16.msra.mxu0 0
        %893 = vmatprep.subr.bf16.mxu0 0
        %894 = vmatpush1.bf16.msra.mxu0 0
        %895 = vmatprep.mubr.bf16.mxu0 0
        %896 = vmatmul.mubr.bf16.gmra.mrb[0].mxu0 %v858
        %v897 = vpop.f32.mrb[0].mxu0
        %v898 = vadd.f32 %v280, %v897
        %v899 = vpop.f32.mrb[0].mxu0
        %v900 = vpop.f32.mrb[0].mxu0
        %v901 = vpop.f32.mrb[0].mxu0
        %902 = vdwg.mxu0
        %v903 = vlaneseq
        %v904 = vshrl.u32 %v903, 7
        %v905 = vsub.s32 0, %v904
        %v906 = vrot.slane %v898, %v905
        %v907 = vadd.f32 %v662, %v906
        %v908 = vadd.f32 %v663, %v906
        %v909 = vadd.f32 %v907, %v281
        %v910 = vadd.f32 %v908, %v282
        %v911 = vmax.f32 %v909, 0.0
        %v912 = vmax.f32 %v910, 0.0
        %913 = vst [vmem:[%s271] sm:$0xff] %v911
        %914 = vst [vmem:[%s271 + $0x8] sm:$0xff] %v912
        %s915 = sand.u32 %s181, 1
        %s916 = scalar_lea.sflag [#allocation3], %s915
        %s917 = sand.u32 %s181, 1
        %s918 = smul.addr %s917, 16
        %s919 = scalar_lea.vmem [#allocation2], %s918
        // Predicated region
        $region49: #{bottleneck_forward.1} parent=47 // pred_check
          %p920 = pneg %p191
        $region50: #{bottleneck_forward.1} parent=47 // pred_check_branch
          %922 = sbr.rel (%p920) target = $region52
        $region51: #{bottleneck_forward.1} parent=47 // pred_region
          %s924 = ssub.s32 256, 256
          %925 = vsyncadd %s916, %s924
          %s926 = smul.addr %s21, 2
          %s927 = smul.addr %s926, 128
          %s928 = scalar_lea.hbm %s7, %s927
          %s929 = sshll.u32 %s919, 4
          %s930 = int_to_ptr.vmem [resolvable:$true] %s929
          %935 = dma.vmem_to_hbm [thread:$0]  %s930, 256, %s928, %s916, 128, 128, 8
        $region52: #{bottleneck_forward.1} parent=47 // pred_fallthru
          _
      $region48: #{bottleneck_forward.1} parent=5 // pred_fallthru
        _
      %p936 = scmp.le.s32.totalorder 2, %s16
      // Predicated region
      $region53: #{bottleneck_forward.1} parent=5 // pred_check
        %p937 = pneg %p936
      $region54: #{bottleneck_forward.1} parent=5 // pred_check_branch
        %939 = sbr.rel (%p937) target = $region56
      $region55: #{bottleneck_forward.1} parent=5 // pred_region
        %s940 = ssub.s32 %s16, 2
        // Predicated region
        $region57: #{bottleneck_forward.1} parent=55 // pred_check
          %p941 = pneg %p197
        $region58: #{bottleneck_forward.1} parent=55 // pred_check_branch
          %943 = sbr.rel (%p941) target = $region60
        $region59: #{bottleneck_forward.1} parent=55 // pred_region
          %s944 = sand.u32 %s182, 1
          %s945 = scalar_lea.sflag [#allocation3], %s944
          %s946 = sand.u32 %s182, 1
          %s947 = smul.addr %s946, 16
          %s948 = scalar_lea.vmem [#allocation2], %s947
          %949 = dma.done %s945, 256
        $region60: #{bottleneck_forward.1} parent=55 // pred_fallthru
          _
      $region56: #{bottleneck_forward.1} parent=5 // pred_fallthru
        _
    $region6: #{bottleneck_forward.1} parent=1 // loop_footer
      %s20 = sadd.s32 1, %s16
    $region7: #{bottleneck_forward.1} parent=1 // loop_footer_branch
      %15 = sbr.rel target = $region3
    $region8: #{bottleneck_forward.1} parent=1 // loop_exit
      _
    %950 = vsyncpa [#allocation3], 1
    %s951 = scalar_lea.sflag [#allocation3], 1
    %952 = vsyncpa %s951, 1

</llo_original>
